<compile_context>
chip_gen: v5e
topology: v5e:2x2
jax: 0.10.0
libtpu: 0.0.40
codegen_flags: <defaults>
</compile_context>

<pallas_src>
import functools

import numpy as np

import jax
import jax.numpy as jnp
from jax import lax
from jax.experimental import pallas as pl
from jax.experimental.pallas import tpu as pltpu

LANES = 128
CHUNK_ROWS = 32          # int8-native (32, 128) chunk; temporaries stay in vregs
_MAX_TILE_ROWS = 2048    # 2048 rows x 128 lanes = 256K samples per grid step
NUM_SPLITS = 2           # leading 'parallel' axis (v7x megacore; no-op on 1-TC chips)


def _round_up(x, m):
    return ((x + m - 1) // m) * m


def _group_counts_kernel(thres_ref, preds_ref, trues_ref, attrs_ref, out_ref,
                         *, num_cols, num_groups_max, tile_rows, chunk_rows):
    """Accumulate dense per-(column, group, stat) (8,128) partial sums.

    thres_ref : (1, 1) f32 in SMEM
    preds_ref : (tile_rows, 128) f32 block (probabilities)
    trues_ref : (tile_rows, 128) i8  block (0/1 labels)
    attrs_ref : (C, tile_rows, 128) i8/i32 block (group ids; -1 = padding)
    out_ref   : (C*G*4*8, 128) f32 slab, resident across the inner grid axis,
                one slab per 'parallel' split.  Row layout per (c, g):
                8 sublanes each of [count, sum(pp), sum(t), sum(pp*t)].
    """
    thres = thres_ref[0, 0]
    nchunks = tile_rows // chunk_rows
    sub = chunk_rows // 8
    n_acc = num_cols * num_groups_max * 4

    def fold(x):
        # (chunk_rows,128) -> (8,128): sums whole vregs only (pure VPU adds).
        return x.reshape(sub, 8, LANES).sum(axis=0)

    def chunk_body(ci, carry):
        r0 = pl.multiple_of(ci * chunk_rows, chunk_rows)
        preds = preds_ref[pl.ds(r0, chunk_rows), :]                  # f32
        t = trues_ref[pl.ds(r0, chunk_rows), :].astype(jnp.float32)
        # Reference (compute_accuracy_per_group) binarizes with '>'.
        pp = (preds > thres).astype(jnp.float32)
        ppt = pp * t

        new = []
        k = 0
        for c in range(num_cols):
            # Cast per chunk (32,128) only — never the whole tile.
            ac = attrs_ref[c, pl.ds(r0, chunk_rows), :].astype(jnp.int32)
            for g in range(num_groups_max):
                gm = (ac == g).astype(jnp.float32)                   # group mask
                new.append(carry[k] + fold(gm)); k += 1              # count
                new.append(carry[k] + fold(gm * pp)); k += 1         # pred pos
                new.append(carry[k] + fold(gm * t)); k += 1          # true pos
                new.append(carry[k] + fold(gm * ppt)); k += 1        # TP term
        return new

    init = [jnp.zeros((8, LANES), jnp.float32)] * n_acc
    parts = lax.fori_loop(0, nchunks, chunk_body, init,
                          unroll=min(8, nchunks))

    partial = jnp.concatenate(parts, axis=0)                         # (n_acc*8, 128)

    # One dense, aligned block commit per grid step (no masked row RMWs, and
    # no separate zero-init pass on the first step).
    @pl.when(pl.program_id(1) == 0)
    def _first():
        out_ref[...] = partial

    @pl.when(pl.program_id(1) != 0)
    def _rest():
        out_ref[...] += partial


@functools.partial(jax.jit, static_argnames=("num_groups_max",))
def per_group_lane_counts(preds, trues, attrs, thres, *, num_groups_max):
    """One fused Pallas launch over all attribute columns.

    preds : (N,) probabilities
    trues : (N,) 0/1 labels
    attrs : (N, C) group ids in [0, num_groups); padding uses -1
    Returns (NUM_SPLITS, C*num_groups_max*4*8, 128) f32 partial sums.
    """
    n = preds.shape[0]
    C = attrs.shape[1]

    small_groups = num_groups_max <= 127
    attrs_dtype = jnp.int8 if small_groups else jnp.int32
    attr_bytes = 1 if small_groups else 4

    rows = max(pl.cdiv(n, LANES), 1)
    tile_rows = min(_MAX_TILE_ROWS,
                    _round_up(pl.cdiv(rows, NUM_SPLITS), CHUNK_ROWS))
    tiles_per_split = pl.cdiv(rows, NUM_SPLITS * tile_rows)
    rows_pad = NUM_SPLITS * tiles_per_split * tile_rows
    n_pad = rows_pad * LANES
    pad = n_pad - n

    # Single pad per array (preds/trues pad with 0; attrs pad with -1 so the
    # padded samples match no group and need no extra in-kernel masking).
    preds_p = jnp.pad(preds.reshape(-1).astype(jnp.float32),
                      (0, pad)).reshape(rows_pad, LANES)
    trues_p = jnp.pad(trues.reshape(-1).astype(jnp.int8),
                      (0, pad)).reshape(rows_pad, LANES)
    attrs_p = jnp.pad(attrs.T.astype(attrs_dtype), ((0, 0), (0, pad)),
                      constant_values=-1).reshape(C, rows_pad, LANES)
    thres2 = jnp.asarray(thres, jnp.float32).reshape(1, 1)

    out_rows = C * num_groups_max * 4 * 8
    grid = (NUM_SPLITS, tiles_per_split)

    # VMEM budget from actual need: 2x double-buffered input blocks + resident
    # output slab + small chunk temporaries; stays well under v7x's 64 MiB.
    tile_bytes = tile_rows * LANES * (4 + 1 + C * attr_bytes)
    out_bytes = out_rows * LANES * 4
    vmem_limit = int(min(64 * 1024 * 1024,
                         max(8 * 1024 * 1024,
                             3 * tile_bytes + 8 * out_bytes + (2 << 20))))

    kernel = functools.partial(_group_counts_kernel,
                               num_cols=C, num_groups_max=num_groups_max,
                               tile_rows=tile_rows, chunk_rows=CHUNK_ROWS)

    return pl.pallas_call(
        kernel,
        out_shape=jax.ShapeDtypeStruct((NUM_SPLITS, out_rows, LANES),
                                       jnp.float32),
        grid=grid,
        in_specs=[
            pl.BlockSpec(memory_space=pltpu.MemorySpace.SMEM),           # thres
            pl.BlockSpec((tile_rows, LANES),
                         lambda p, i: (p * tiles_per_split + i, 0)),     # preds
            pl.BlockSpec((tile_rows, LANES),
                         lambda p, i: (p * tiles_per_split + i, 0)),     # trues
            pl.BlockSpec((C, tile_rows, LANES),
                         lambda p, i: (0, p * tiles_per_split + i, 0)),  # attrs
        ],
        out_specs=pl.BlockSpec((None, out_rows, LANES),
                               lambda p, i: (p, 0, 0)),                  # resident
        compiler_params=pltpu.CompilerParams(
            dimension_semantics=("parallel", "arbitrary"),
            vmem_limit_bytes=vmem_limit,
        ),
    )(thres2, preds_p, trues_p, attrs_p)


def _derive_metrics(tp, fp, tn, fn):
    # Same formulas as the reference; divisions intentionally unguarded so
    # empty/degenerate groups yield NaN/Inf exactly like the PyTorch version.
    with np.errstate(divide="ignore", invalid="ignore"):
        acc = (tp + tn) / (tp + fp + tn + fn)
        fpr = fp / (fp + tn)
        tpr = tp / (tp + fn)
        fdr = fp / (tp + fp)
    return acc, fpr, tpr, fdr


class GroupBasedStats:
    """JAX/Pallas port of the PyTorch GroupBasedStats module."""

    def __init__(self, num_groups):
        self.y_preds = []
        self.y_trues = []
        self.group_attrbs = []
        self.num_groups = list(num_groups)   # #groups per sensitive-attr column
        self.thres = None
        self._counts_cache = None

    # forward() in the PyTorch module: pure host-side buffering.
    def __call__(self, y_pred, y_true, group):
        self.y_preds.append(jnp.asarray(y_pred))
        self.y_trues.append(jnp.asarray(y_true))
        self.group_attrbs.append(jnp.asarray(group))
        self._counts_cache = None
        return None

    forward = __call__

    def set_thres(self, th):
        self.thres = float(th)
        self._counts_cache = None

    def _per_column_counts(self):
        """(C, G_max, 4) numpy [tp, fp, tn, fn]; one launch + one transfer."""
        if self._counts_cache is not None:
            return self._counts_cache

        y_preds = jnp.concatenate([p.reshape(-1) for p in self.y_preds], axis=0)
        y_trues = jnp.concatenate([t.reshape(-1) for t in self.y_trues], axis=0)
        attrs = jnp.concatenate(
            [g.reshape(g.shape[0], -1) for g in self.group_attrbs], axis=0)
        C = attrs.shape[1]
        g_max = max(self.num_groups)

        lane = per_group_lane_counts(y_preds, y_trues, attrs, self.thres,
                                     num_groups_max=g_max)
        jax.block_until_ready(lane)
        lane = np.asarray(jax.device_get(lane), dtype=np.float64)

        # (splits, C*G*4*8, 128): sum splits + lanes, then the 8 sublanes.
        raw = lane.sum(axis=(0, 2)).reshape(C, g_max, 4, 8).sum(axis=-1)
        cnt, sp, st, stp = raw[..., 0], raw[..., 1], raw[..., 2], raw[..., 3]
        tp = stp
        fp = sp - stp
        fn = st - stp
        tn = cnt - sp - st + stp
        self._counts_cache = np.stack([tp, fp, tn, fn], axis=-1)  # (C, G_max, 4)
        return self._counts_cache

    def computer_per_group_acc(self):
        counts = self._per_column_counts()
        group_accs, group_gaps = [], []
        for i, g_cnt in enumerate(self.num_groups):
            tp, fp, tn, fn = (counts[i, :g_cnt, k] for k in range(4))
            acc, _, _, _ = _derive_metrics(tp, fp, tn, fn)
            accs = [float(a) for a in acc]
            group_accs.append(accs)
            group_gaps.append(max(accs) - min(accs))
        return group_accs, group_gaps

    def computer_per_group_fpr(self):
        counts = self._per_column_counts()
        group_fprs = []
        for i, g_cnt in enumerate(self.num_groups):
            tp, fp, tn, fn = (counts[i, :g_cnt, k] for k in range(4))
            _, fpr, _, _ = _derive_metrics(tp, fp, tn, fn)
            group_fprs.append([float(f) for f in fpr])
        return group_fprs

    def computer_per_group_classification_metrics(self):
        counts = self._per_column_counts()
        group_metrics = []
        for i, g_cnt in enumerate(self.num_groups):
            tp, fp, tn, fn = (counts[i, :g_cnt, k] for k in range(4))
            acc, fpr, tpr, fdr = _derive_metrics(tp, fp, tn, fn)
            per_group = []
            for g in range(g_cnt):
                per_group.append({
                    "accuracy": float(acc[g]),
                    "fpr": float(fpr[g]),
                    "tpr": float(tpr[g]),
                    "fdr": float(fdr[g]),
                })
            group_metrics.append(per_group)
        return group_metrics


if __name__ == "__main__":
    # No learned parameters: this module is a metrics accumulator.
    key = jax.random.PRNGKey(0)

    batch = 4
    n_batches = 8
    n = batch * n_batches                     # 32 samples total
    num_groups = [2, 3]                       # two sensitive-attribute columns

    idx = jnp.arange(n)
    all_preds = jax.random.uniform(key, (n,), dtype=jnp.float32)   # probs
    all_trues = (idx % 2).astype(jnp.int32)                        # 0/1 labels
    g0 = ((idx // 2) % 2).astype(jnp.int32)                        # 2 groups
    g1 = ((idx // 4) % 3).astype(jnp.int32)                        # 3 groups
    all_groups = jnp.stack([g0, g1], axis=-1)                      # (N, 2)

    stats_mod = GroupBasedStats(num_groups)
    for b in range(n_batches):
        s = b * batch
        stats_mod(all_preds[s:s + batch],
                  all_trues[s:s + batch],
                  all_groups[s:s + batch])
    stats_mod.set_thres(0.5)

    group_accs, group_gaps = stats_mod.computer_per_group_acc()
    group_fprs = stats_mod.computer_per_group_fpr()
    group_metrics = stats_mod.computer_per_group_classification_metrics()

    # ---- host-side reference check (numpy) ----
    p = np.asarray(all_preds)
    t = np.asarray(all_trues)
    ga = np.asarray(all_groups)
    pp = (p > 0.5).astype(np.int64)
    for i, g_cnt in enumerate(num_groups):
        for g in range(g_cnt):
            m = ga[:, i] == g
            tp = int(np.sum(m & (pp == 1) & (t == 1)))
            fp = int(np.sum(m & (pp == 1) & (t == 0)))
            tn = int(np.sum(m & (pp == 0) & (t == 0)))
            fn = int(np.sum(m & (pp == 0) & (t == 1)))
            ref_acc = (tp + tn) / (tp + fp + tn + fn)
            ref_fpr = fp / (fp + tn)
            assert abs(group_accs[i][g] - ref_acc) < 1e-6, (i, g, "acc")
            assert abs(group_fprs[i][g] - ref_fpr) < 1e-6, (i, g, "fpr")
            assert abs(group_metrics[i][g]["accuracy"] - ref_acc) < 1e-6, (i, g)
    assert len(group_gaps) == len(num_groups)

    print("KERNEL_OK")
</pallas_src>

<mosaic_0001>
module attributes {stable_mosaic.version = 11 : i64} {
  func.func @_group_counts_kernel(%arg0: i32, %arg1: i32, %arg2: memref<1x1xf32, #tpu.memory_space<smem>>, %arg3: memref<32x128xf32, #tpu.memory_space<vmem>>, %arg4: memref<32x128xi8, #tpu.memory_space<vmem>>, %arg5: memref<2x32x128xi8, #tpu.memory_space<vmem>>, %arg6: memref<1x192x128xf32, #tpu.memory_space<vmem>>) attributes {dimension_semantics = [#tpu.dimension_semantics<parallel>, #tpu.dimension_semantics<arbitrary>], iteration_bounds = array<i64: 2, 1>, scalar_prefetch = 0 : i64, scratch_operands = 0 : i64, tpu.core_type = #tpu.core_type<tc>, window_params = [{transform_indices = @transform_0, window_bounds = array<i64: 1, 1>}, {transform_indices = @transform_1, window_bounds = array<i64: 32, 128>}, {transform_indices = @transform_2, window_bounds = array<i64: 32, 128>}, {transform_indices = @transform_3, window_bounds = array<i64: 2, 32, 128>}, {transform_indices = @transform_4, window_bounds = array<i64: 1, 192, 128>}]} {
    %c0 = arith.constant 0 : index
    %c0_0 = arith.constant 0 : index
    %0 = memref.load %arg2[%c0, %c0_0] : memref<1x1xf32, #tpu.memory_space<smem>>
    %cst = arith.constant 0.000000e+00 : f32
    %1 = vector.broadcast %cst : f32 to vector<8x128xf32>
    %c0_i32 = arith.constant 0 : i32
    %c32_i32 = arith.constant 32 : i32
    %2 = arith.muli %c0_i32, %c32_i32 : i32
    %3 = tpu.assume_multiple %2, 32 : i32
    %4 = arith.index_cast %3 : i32 to index
    %c0_1 = arith.constant 0 : index
    %5 = vector.load %arg3[%4, %c0_1] : memref<32x128xf32, #tpu.memory_space<vmem>>, vector<32x128xf32>
    %6 = arith.index_cast %3 : i32 to index
    %c0_2 = arith.constant 0 : index
    %7 = vector.load %arg4[%6, %c0_2] : memref<32x128xi8, #tpu.memory_space<vmem>>, vector<32x128xi8>
    %8 = arith.sitofp %7 : vector<32x128xi8> to vector<32x128xf32>
    %9 = vector.broadcast %0 : f32 to vector<32x128xf32>
    %10 = arith.cmpf ogt, %5, %9 : vector<32x128xf32>
    %11 = arith.extui %10 : vector<32x128xi1> to vector<32x128xi32>
    %12 = arith.sitofp %11 : vector<32x128xi32> to vector<32x128xf32>
    %13 = arith.mulf %12, %8 : vector<32x128xf32>
    %c0_3 = arith.constant 0 : index
    %14 = arith.index_cast %3 : i32 to index
    %c0_4 = arith.constant 0 : index
    %15 = vector.load %arg5[%c0_3, %14, %c0_4] : memref<2x32x128xi8, #tpu.memory_space<vmem>>, vector<1x32x128xi8>
    %16 = vector.shape_cast %15 : vector<1x32x128xi8> to vector<32x128xi8>
    %17 = arith.extsi %16 : vector<32x128xi8> to vector<32x128xi32>
    %c0_i32_5 = arith.constant 0 : i32
    %18 = vector.broadcast %c0_i32_5 : i32 to vector<32x128xi32>
    %19 = arith.cmpi eq, %17, %18 : vector<32x128xi32>
    %20 = arith.extui %19 : vector<32x128xi1> to vector<32x128xi32>
    %21 = arith.sitofp %20 : vector<32x128xi32> to vector<32x128xf32>
    %22 = vector.shape_cast %21 : vector<32x128xf32> to vector<4x8x128xf32>
    %cst_6 = arith.constant dense<0.000000e+00> : vector<8x128xf32>
    %23 = vector.multi_reduction <add>, %22, %cst_6 [0] : vector<4x8x128xf32> to vector<8x128xf32>
    %24 = arith.addf %1, %23 : vector<8x128xf32>
    %25 = arith.mulf %21, %12 : vector<32x128xf32>
    %26 = vector.shape_cast %25 : vector<32x128xf32> to vector<4x8x128xf32>
    %cst_7 = arith.constant dense<0.000000e+00> : vector<8x128xf32>
    %27 = vector.multi_reduction <add>, %26, %cst_7 [0] : vector<4x8x128xf32> to vector<8x128xf32>
    %28 = arith.addf %1, %27 : vector<8x128xf32>
    %29 = arith.mulf %21, %8 : vector<32x128xf32>
    %30 = vector.shape_cast %29 : vector<32x128xf32> to vector<4x8x128xf32>
    %cst_8 = arith.constant dense<0.000000e+00> : vector<8x128xf32>
    %31 = vector.multi_reduction <add>, %30, %cst_8 [0] : vector<4x8x128xf32> to vector<8x128xf32>
    %32 = arith.addf %1, %31 : vector<8x128xf32>
    %33 = arith.mulf %21, %13 : vector<32x128xf32>
    %34 = vector.shape_cast %33 : vector<32x128xf32> to vector<4x8x128xf32>
    %cst_9 = arith.constant dense<0.000000e+00> : vector<8x128xf32>
    %35 = vector.multi_reduction <add>, %34, %cst_9 [0] : vector<4x8x128xf32> to vector<8x128xf32>
    %36 = arith.addf %1, %35 : vector<8x128xf32>
    %c1_i32 = arith.constant 1 : i32
    %37 = vector.broadcast %c1_i32 : i32 to vector<32x128xi32>
    %38 = arith.cmpi eq, %17, %37 : vector<32x128xi32>
    %39 = arith.extui %38 : vector<32x128xi1> to vector<32x128xi32>
    %40 = arith.sitofp %39 : vector<32x128xi32> to vector<32x128xf32>
    %41 = vector.shape_cast %40 : vector<32x128xf32> to vector<4x8x128xf32>
    %cst_10 = arith.constant dense<0.000000e+00> : vector<8x128xf32>
    %42 = vector.multi_reduction <add>, %41, %cst_10 [0] : vector<4x8x128xf32> to vector<8x128xf32>
    %43 = arith.addf %1, %42 : vector<8x128xf32>
    %44 = arith.mulf %40, %12 : vector<32x128xf32>
    %45 = vector.shape_cast %44 : vector<32x128xf32> to vector<4x8x128xf32>
    %cst_11 = arith.constant dense<0.000000e+00> : vector<8x128xf32>
    %46 = vector.multi_reduction <add>, %45, %cst_11 [0] : vector<4x8x128xf32> to vector<8x128xf32>
    %47 = arith.addf %1, %46 : vector<8x128xf32>
    %48 = arith.mulf %40, %8 : vector<32x128xf32>
    %49 = vector.shape_cast %48 : vector<32x128xf32> to vector<4x8x128xf32>
    %cst_12 = arith.constant dense<0.000000e+00> : vector<8x128xf32>
    %50 = vector.multi_reduction <add>, %49, %cst_12 [0] : vector<4x8x128xf32> to vector<8x128xf32>
    %51 = arith.addf %1, %50 : vector<8x128xf32>
    %52 = arith.mulf %40, %13 : vector<32x128xf32>
    %53 = vector.shape_cast %52 : vector<32x128xf32> to vector<4x8x128xf32>
    %cst_13 = arith.constant dense<0.000000e+00> : vector<8x128xf32>
    %54 = vector.multi_reduction <add>, %53, %cst_13 [0] : vector<4x8x128xf32> to vector<8x128xf32>
    %55 = arith.addf %1, %54 : vector<8x128xf32>
    %c2_i32 = arith.constant 2 : i32
    %56 = vector.broadcast %c2_i32 : i32 to vector<32x128xi32>
    %57 = arith.cmpi eq, %17, %56 : vector<32x128xi32>
    %58 = arith.extui %57 : vector<32x128xi1> to vector<32x128xi32>
    %59 = arith.sitofp %58 : vector<32x128xi32> to vector<32x128xf32>
    %60 = vector.shape_cast %59 : vector<32x128xf32> to vector<4x8x128xf32>
    %cst_14 = arith.constant dense<0.000000e+00> : vector<8x128xf32>
    %61 = vector.multi_reduction <add>, %60, %cst_14 [0] : vector<4x8x128xf32> to vector<8x128xf32>
    %62 = arith.addf %1, %61 : vector<8x128xf32>
    %63 = arith.mulf %59, %12 : vector<32x128xf32>
    %64 = vector.shape_cast %63 : vector<32x128xf32> to vector<4x8x128xf32>
    %cst_15 = arith.constant dense<0.000000e+00> : vector<8x128xf32>
    %65 = vector.multi_reduction <add>, %64, %cst_15 [0] : vector<4x8x128xf32> to vector<8x128xf32>
    %66 = arith.addf %1, %65 : vector<8x128xf32>
    %67 = arith.mulf %59, %8 : vector<32x128xf32>
    %68 = vector.shape_cast %67 : vector<32x128xf32> to vector<4x8x128xf32>
    %cst_16 = arith.constant dense<0.000000e+00> : vector<8x128xf32>
    %69 = vector.multi_reduction <add>, %68, %cst_16 [0] : vector<4x8x128xf32> to vector<8x128xf32>
    %70 = arith.addf %1, %69 : vector<8x128xf32>
    %71 = arith.mulf %59, %13 : vector<32x128xf32>
    %72 = vector.shape_cast %71 : vector<32x128xf32> to vector<4x8x128xf32>
    %cst_17 = arith.constant dense<0.000000e+00> : vector<8x128xf32>
    %73 = vector.multi_reduction <add>, %72, %cst_17 [0] : vector<4x8x128xf32> to vector<8x128xf32>
    %74 = arith.addf %1, %73 : vector<8x128xf32>
    %c1 = arith.constant 1 : index
    %75 = arith.index_cast %3 : i32 to index
    %c0_18 = arith.constant 0 : index
    %76 = vector.load %arg5[%c1, %75, %c0_18] : memref<2x32x128xi8, #tpu.memory_space<vmem>>, vector<1x32x128xi8>
    %77 = vector.shape_cast %76 : vector<1x32x128xi8> to vector<32x128xi8>
    %78 = arith.extsi %77 : vector<32x128xi8> to vector<32x128xi32>
    %c0_i32_19 = arith.constant 0 : i32
    %79 = vector.broadcast %c0_i32_19 : i32 to vector<32x128xi32>
    %80 = arith.cmpi eq, %78, %79 : vector<32x128xi32>
    %81 = arith.extui %80 : vector<32x128xi1> to vector<32x128xi32>
    %82 = arith.sitofp %81 : vector<32x128xi32> to vector<32x128xf32>
    %83 = vector.shape_cast %82 : vector<32x128xf32> to vector<4x8x128xf32>
    %cst_20 = arith.constant dense<0.000000e+00> : vector<8x128xf32>
    %84 = vector.multi_reduction <add>, %83, %cst_20 [0] : vector<4x8x128xf32> to vector<8x128xf32>
    %85 = arith.addf %1, %84 : vector<8x128xf32>
    %86 = arith.mulf %82, %12 : vector<32x128xf32>
    %87 = vector.shape_cast %86 : vector<32x128xf32> to vector<4x8x128xf32>
    %cst_21 = arith.constant dense<0.000000e+00> : vector<8x128xf32>
    %88 = vector.multi_reduction <add>, %87, %cst_21 [0] : vector<4x8x128xf32> to vector<8x128xf32>
    %89 = arith.addf %1, %88 : vector<8x128xf32>
    %90 = arith.mulf %82, %8 : vector<32x128xf32>
    %91 = vector.shape_cast %90 : vector<32x128xf32> to vector<4x8x128xf32>
    %cst_22 = arith.constant dense<0.000000e+00> : vector<8x128xf32>
    %92 = vector.multi_reduction <add>, %91, %cst_22 [0] : vector<4x8x128xf32> to vector<8x128xf32>
    %93 = arith.addf %1, %92 : vector<8x128xf32>
    %94 = arith.mulf %82, %13 : vector<32x128xf32>
    %95 = vector.shape_cast %94 : vector<32x128xf32> to vector<4x8x128xf32>
    %cst_23 = arith.constant dense<0.000000e+00> : vector<8x128xf32>
    %96 = vector.multi_reduction <add>, %95, %cst_23 [0] : vector<4x8x128xf32> to vector<8x128xf32>
    %97 = arith.addf %1, %96 : vector<8x128xf32>
    %c1_i32_24 = arith.constant 1 : i32
    %98 = vector.broadcast %c1_i32_24 : i32 to vector<32x128xi32>
    %99 = arith.cmpi eq, %78, %98 : vector<32x128xi32>
    %100 = arith.extui %99 : vector<32x128xi1> to vector<32x128xi32>
    %101 = arith.sitofp %100 : vector<32x128xi32> to vector<32x128xf32>
    %102 = vector.shape_cast %101 : vector<32x128xf32> to vector<4x8x128xf32>
    %cst_25 = arith.constant dense<0.000000e+00> : vector<8x128xf32>
    %103 = vector.multi_reduction <add>, %102, %cst_25 [0] : vector<4x8x128xf32> to vector<8x128xf32>
    %104 = arith.addf %1, %103 : vector<8x128xf32>
    %105 = arith.mulf %101, %12 : vector<32x128xf32>
    %106 = vector.shape_cast %105 : vector<32x128xf32> to vector<4x8x128xf32>
    %cst_26 = arith.constant dense<0.000000e+00> : vector<8x128xf32>
    %107 = vector.multi_reduction <add>, %106, %cst_26 [0] : vector<4x8x128xf32> to vector<8x128xf32>
    %108 = arith.addf %1, %107 : vector<8x128xf32>
    %109 = arith.mulf %101, %8 : vector<32x128xf32>
    %110 = vector.shape_cast %109 : vector<32x128xf32> to vector<4x8x128xf32>
    %cst_27 = arith.constant dense<0.000000e+00> : vector<8x128xf32>
    %111 = vector.multi_reduction <add>, %110, %cst_27 [0] : vector<4x8x128xf32> to vector<8x128xf32>
    %112 = arith.addf %1, %111 : vector<8x128xf32>
    %113 = arith.mulf %101, %13 : vector<32x128xf32>
    %114 = vector.shape_cast %113 : vector<32x128xf32> to vector<4x8x128xf32>
    %cst_28 = arith.constant dense<0.000000e+00> : vector<8x128xf32>
    %115 = vector.multi_reduction <add>, %114, %cst_28 [0] : vector<4x8x128xf32> to vector<8x128xf32>
    %116 = arith.addf %1, %115 : vector<8x128xf32>
    %c2_i32_29 = arith.constant 2 : i32
    %117 = vector.broadcast %c2_i32_29 : i32 to vector<32x128xi32>
    %118 = arith.cmpi eq, %78, %117 : vector<32x128xi32>
    %119 = arith.extui %118 : vector<32x128xi1> to vector<32x128xi32>
    %120 = arith.sitofp %119 : vector<32x128xi32> to vector<32x128xf32>
    %121 = vector.shape_cast %120 : vector<32x128xf32> to vector<4x8x128xf32>
    %cst_30 = arith.constant dense<0.000000e+00> : vector<8x128xf32>
    %122 = vector.multi_reduction <add>, %121, %cst_30 [0] : vector<4x8x128xf32> to vector<8x128xf32>
    %123 = arith.addf %1, %122 : vector<8x128xf32>
    %124 = arith.mulf %120, %12 : vector<32x128xf32>
    %125 = vector.shape_cast %124 : vector<32x128xf32> to vector<4x8x128xf32>
    %cst_31 = arith.constant dense<0.000000e+00> : vector<8x128xf32>
    %126 = vector.multi_reduction <add>, %125, %cst_31 [0] : vector<4x8x128xf32> to vector<8x128xf32>
    %127 = arith.addf %1, %126 : vector<8x128xf32>
    %128 = arith.mulf %120, %8 : vector<32x128xf32>
    %129 = vector.shape_cast %128 : vector<32x128xf32> to vector<4x8x128xf32>
    %cst_32 = arith.constant dense<0.000000e+00> : vector<8x128xf32>
    %130 = vector.multi_reduction <add>, %129, %cst_32 [0] : vector<4x8x128xf32> to vector<8x128xf32>
    %131 = arith.addf %1, %130 : vector<8x128xf32>
    %132 = arith.mulf %120, %13 : vector<32x128xf32>
    %133 = vector.shape_cast %132 : vector<32x128xf32> to vector<4x8x128xf32>
    %cst_33 = arith.constant dense<0.000000e+00> : vector<8x128xf32>
    %134 = vector.multi_reduction <add>, %133, %cst_33 [0] : vector<4x8x128xf32> to vector<8x128xf32>
    %135 = arith.addf %1, %134 : vector<8x128xf32>
    %c1_i32_34 = arith.constant 1 : i32
    %136 = tpu.concatenate %24, %28, %32, %36, %43, %47, %51, %55, %62, %66, %70, %74, %85, %89, %93, %97 in 0 : vector<8x128xf32>, vector<8x128xf32>, vector<8x128xf32>, vector<8x128xf32>, vector<8x128xf32>, vector<8x128xf32>, vector<8x128xf32>, vector<8x128xf32>, vector<8x128xf32>, vector<8x128xf32>, vector<8x128xf32>, vector<8x128xf32>, vector<8x128xf32>, vector<8x128xf32>, vector<8x128xf32>, vector<8x128xf32> -> vector<128x128xf32>
    %137 = tpu.concatenate %104, %108, %112, %116, %123, %127, %131, %135 in 0 : vector<8x128xf32>, vector<8x128xf32>, vector<8x128xf32>, vector<8x128xf32>, vector<8x128xf32>, vector<8x128xf32>, vector<8x128xf32>, vector<8x128xf32> -> vector<64x128xf32>
    %138 = tpu.concatenate %136, %137 in 0 : vector<128x128xf32>, vector<64x128xf32> -> vector<192x128xf32>
    %c0_i32_35 = arith.constant 0 : i32
    %139 = arith.cmpi eq, %arg1, %c0_i32_35 : i32
    %140 = arith.extui %139 : i1 to i32
    %c0_i32_36 = arith.constant 0 : i32
    %141 = arith.cmpi ne, %140, %c0_i32_36 : i32
    scf.if %141 {
      %c0_39 = arith.constant 0 : index
      %c0_40 = arith.constant 0 : index
      %c0_41 = arith.constant 0 : index
      %145 = vector.load %arg6[%c0_39, %c0_40, %c0_41] : memref<1x192x128xf32, #tpu.memory_space<vmem>>, vector<1x192x128xf32>
      %146 = vector.shape_cast %145 : vector<1x192x128xf32> to vector<192x128xf32>
      %147 = vector.shape_cast %138 : vector<192x128xf32> to vector<1x192x128xf32>
      tpu.vector_store %arg6[%c0_39, %c0_40, %c0_41], %147 {strides = array<i32>} : memref<1x192x128xf32, #tpu.memory_space<vmem>>, vector<1x192x128xf32>,
    } else {
    }
    %c0_i32_37 = arith.constant 0 : i32
    %142 = arith.cmpi ne, %arg1, %c0_i32_37 : i32
    %143 = arith.extui %142 : i1 to i32
    %c0_i32_38 = arith.constant 0 : i32
    %144 = arith.cmpi ne, %143, %c0_i32_38 : i32
    scf.if %144 {
      %c0_39 = arith.constant 0 : index
      %c0_40 = arith.constant 0 : index
      %c0_41 = arith.constant 0 : index
      %145 = vector.load %arg6[%c0_39, %c0_40, %c0_41] : memref<1x192x128xf32, #tpu.memory_space<vmem>>, vector<1x192x128xf32>
      %146 = vector.shape_cast %145 : vector<1x192x128xf32> to vector<192x128xf32>
      %147 = arith.addf %146, %138 : vector<192x128xf32>
      %c0_42 = arith.constant 0 : index
      %c0_43 = arith.constant 0 : index
      %c0_44 = arith.constant 0 : index
      %148 = vector.load %arg6[%c0_42, %c0_43, %c0_44] : memref<1x192x128xf32, #tpu.memory_space<vmem>>, vector<1x192x128xf32>
      %149 = vector.shape_cast %148 : vector<1x192x128xf32> to vector<192x128xf32>
      %150 = vector.shape_cast %147 : vector<192x128xf32> to vector<1x192x128xf32>
      tpu.vector_store %arg6[%c0_42, %c0_43, %c0_44], %150 {strides = array<i32>} : memref<1x192x128xf32, #tpu.memory_space<vmem>>, vector<1x192x128xf32>,
    } else {
    }
    return
  }
  func.func @transform_0(%arg0: i32, %arg1: i32) -> (i32, i32) {
    %c0_i32 = arith.constant 0 : i32
    %c0_i32_0 = arith.constant 0 : i32
    %c0_i32_1 = arith.constant 0 : i32
    return %c0_i32, %c0_i32_0 : i32, i32
  }
  func.func @transform_1(%arg0: i32, %arg1: i32) -> (i32, i32) {
    %c1_i32 = arith.constant 1 : i32
    %0 = arith.muli %arg0, %c1_i32 : i32
    %1 = arith.addi %0, %arg1 : i32
    %c0_i32 = arith.constant 0 : i32
    %c0_i32_0 = arith.constant 0 : i32
    return %1, %c0_i32 : i32, i32
  }
  func.func @transform_2(%arg0: i32, %arg1: i32) -> (i32, i32) {
    %c1_i32 = arith.constant 1 : i32
    %0 = arith.muli %arg0, %c1_i32 : i32
    %1 = arith.addi %0, %arg1 : i32
    %c0_i32 = arith.constant 0 : i32
    %c0_i32_0 = arith.constant 0 : i32
    return %1, %c0_i32 : i32, i32
  }
  func.func @transform_3(%arg0: i32, %arg1: i32) -> (i32, i32, i32) {
    %c1_i32 = arith.constant 1 : i32
    %0 = arith.muli %arg0, %c1_i32 : i32
    %1 = arith.addi %0, %arg1 : i32
    %c0_i32 = arith.constant 0 : i32
    %c0_i32_0 = arith.constant 0 : i32
    %c0_i32_1 = arith.constant 0 : i32
    return %c0_i32, %1, %c0_i32_0 : i32, i32, i32
  }
  func.func @transform_4(%arg0: i32, %arg1: i32) -> (i32, i32, i32) {
    %c0_i32 = arith.constant 0 : i32
    %c0_i32_0 = arith.constant 0 : i32
    %c0_i32_1 = arith.constant 0 : i32
    return %arg0, %c0_i32, %c0_i32_0 : i32, i32, i32
  }
}

</mosaic_0001>

<llo_original>
// kernel: per_group_lane_counts.1
$region0: #{per_group_lane_counts.1}
  #allocation0 [shape = 'u32[]', space=smem, size = 0x4, offset = 0x4, fixed_abs, tag = 'smem constant byte address 0x4 - core index']
  #allocation1 [shape = 'u32[72,128]{1,0:T(1,128)}', space=vmem, size = 0x9000, scoped, tag = 'internal scratch']
  #allocation2 [shape = 'f32[1,1]{1,0:T(1,128)S(6)}', space=smem, size = 0x200, scoped, tag = 'scoped memory for per_group_lane_counts.1']
  %s0 = inlined_call_operand.<no memory space> [shape: f32[1,1], index: 0, kind: input, shape index: {}]
  %s1 = inlined_call_operand.vmem [shape: f32[64,128], index: 1, kind: input, shape index: {}]
  %s2 = inlined_call_operand.vmem [shape: s8[64,128], index: 2, kind: input, shape index: {}]
  %s3 = inlined_call_operand.vmem [shape: s8[2,64,128], index: 3, kind: input, shape index: {}]
  %s4 = inlined_call_operand.hbm [shape: f32[2,192,128], index: 4, kind: output, shape index: {}]
  %s5 = sld [smem:[#allocation0]]
  $region95: #{per_group_lane_counts.1} parent=0
    _
  %s7 = ssub.s32 1, %s5
  %s8 = scalar_select 0, %s7, %s5
  %9 = sst [smem:[#allocation2]] %s0
  $region1: #{per_group_lane_counts.1} parent=0
    #allocation3 [shape = 'u8[16384]{0}', space=vmem, size = 0x4000, scoped, tag = 'input window, operand 3']
    #allocation4 [shape = 'u8[196608]{0}', space=vmem, size = 0x30000, scoped, tag = 'output window, operand 0']
    #allocation5 [shape = 's32[2]{0}', space=sflag, size = 0x8, scoped, tag = 'scoped memory for per_group_lane_counts.1']
    %10 = vsyncpa [#allocation5], 0
    %s11 = scalar_lea.sflag [#allocation5], 1
    %12 = vsyncpa %s11, 0
    loop: start=0, step=1, limit=4
    $region2: #{per_group_lane_counts.1} parent=1 // loop_pre_header
      _
    $region3: #{per_group_lane_counts.1} parent=1 // loop_header
      %s14 = sphi 0, %s18
      %p15 = scmp.ge.s32.totalorder %s14, 4
      %s21 = sphi 0, %s33
      %s22 = sphi 0, %s29
      %s23 = sphi 0, %s21
      %s24 = sphi 0, %s22
      %s25 = sphi 0, %s23
      %s26 = sphi 0, %s24
      %s34 = sphi 0, %s34
      %s36 = sphi 0, %s34
      %s37 = sphi 0, %s36
      %s51 = sphi 0, %s37
      %s59 = sphi 0, %s61
      %s62 = sphi 0, %s59
      %s63 = sphi 0, %s62
      %s79 = sphi 0, %s63
      %s87 = sphi 0, %s89
      %s90 = sphi 0, %s87
      %s91 = sphi 0, %s90
      %s107 = sphi 0, %s91
      %s115 = sphi 0, %s117
      %s118 = sphi 0, %s115
      %s119 = sphi 0, %s118
      %s135 = sphi 0, %s119
      %s141 = sphi 0, %s143
      %s144 = sphi 0, %s141
      %s145 = sphi 0, %s144
      %s161 = sphi 0, %s145
    $region4: #{per_group_lane_counts.1} parent=1 // loop_header_branch
      %17 = sbr.rel (%p15) target = $region8
    $region5: #{per_group_lane_counts.1} parent=1 // loop_body
      %s19 = ssub.s32 %s14, 1
      %s20 = ssub.s32 %s14, 2
      %s27 = sadd.s32 1, %s22
      %p28 = scmp.ge.s32.totalorder %s27, 1
      %s29 = scalar_select %p28, 0, %s27
      %s30 = sadd.s32 1, %s21
      %s31 = scalar_select %p28, %s30, %s21
      %p32 = scmp.ge.s32.totalorder %s31, 2
      %s33 = scalar_select %p32, 0, %s31
      %s35 = sadd.s32 %s34, 1
      %p38 = scmp.eq.s32.totalorder %s14, 1
      %p39 = scmp.ne.s32.totalorder %s34, %s36
      %p40 = scmp.eq.s32.totalorder %s14, 0
      %p41 = por %p39, %p40
      %p42 = scmp.ne.s32.totalorder %s34, %s36
      %p43 = scmp.eq.s32.totalorder %s19, 1
      %p44 = por %p42, %p43
      %p45 = scmp.ne.s32.totalorder %s36, %s37
      %p46 = scmp.eq.s32.totalorder %s19, 0
      %p47 = por %p45, %p46
      %p48 = scmp.ne.s32.totalorder %s36, %s37
      %p49 = scmp.eq.s32.totalorder %s20, 1
      %p50 = por %p48, %p49
      %p52 = scmp.ne.s32.totalorder %s37, %s51
      %p53 = scmp.eq.s32.totalorder %s20, 0
      %p54 = por %p52, %p53
      %s55 = sadd.s32 %s21, %s22
      %s56 = sadd.s32 %s33, %s29
      %s57 = ssub.s32 %s55, %s56
      %p58 = scmp.eq.s32.totalorder %s57, 0
      %s60 = sadd.s32 %s59, 1
      %s61 = scalar_select %p58, %s59, %s60
      %p64 = pneg %p58
      %p65 = scmp.eq.s32.totalorder %s14, 1
      %p66 = por %p64, %p65
      %p67 = scmp.ne.s32.totalorder %s59, %s62
      %p68 = scmp.eq.s32.totalorder %s14, 0
      %p69 = por %p67, %p68
      %p70 = scmp.ne.s32.totalorder %s59, %s62
      %p71 = scmp.eq.s32.totalorder %s19, 1
      %p72 = por %p70, %p71
      %p73 = scmp.ne.s32.totalorder %s62, %s63
      %p74 = scmp.eq.s32.totalorder %s19, 0
      %p75 = por %p73, %p74
      %p76 = scmp.ne.s32.totalorder %s62, %s63
      %p77 = scmp.eq.s32.totalorder %s20, 1
      %p78 = por %p76, %p77
      %p80 = scmp.ne.s32.totalorder %s63, %s79
      %p81 = scmp.eq.s32.totalorder %s20, 0
      %p82 = por %p80, %p81
      %s83 = sadd.s32 %s21, %s22
      %s84 = sadd.s32 %s33, %s29
      %s85 = ssub.s32 %s83, %s84
      %p86 = scmp.eq.s32.totalorder %s85, 0
      %s88 = sadd.s32 %s87, 1
      %s89 = scalar_select %p86, %s87, %s88
      %p92 = pneg %p86
      %p93 = scmp.eq.s32.totalorder %s14, 1
      %p94 = por %p92, %p93
      %p95 = scmp.ne.s32.totalorder %s87, %s90
      %p96 = scmp.eq.s32.totalorder %s14, 0
      %p97 = por %p95, %p96
      %p98 = scmp.ne.s32.totalorder %s87, %s90
      %p99 = scmp.eq.s32.totalorder %s19, 1
      %p100 = por %p98, %p99
      %p101 = scmp.ne.s32.totalorder %s90, %s91
      %p102 = scmp.eq.s32.totalorder %s19, 0
      %p103 = por %p101, %p102
      %p104 = scmp.ne.s32.totalorder %s90, %s91
      %p105 = scmp.eq.s32.totalorder %s20, 1
      %p106 = por %p104, %p105
      %p108 = scmp.ne.s32.totalorder %s91, %s107
      %p109 = scmp.eq.s32.totalorder %s20, 0
      %p110 = por %p108, %p109
      %s111 = sadd.s32 %s21, %s22
      %s112 = sadd.s32 %s33, %s29
      %s113 = ssub.s32 %s111, %s112
      %p114 = scmp.eq.s32.totalorder %s113, 0
      %s116 = sadd.s32 %s115, 1
      %s117 = scalar_select %p114, %s115, %s116
      %p120 = pneg %p114
      %p121 = scmp.eq.s32.totalorder %s14, 1
      %p122 = por %p120, %p121
      %p123 = scmp.ne.s32.totalorder %s115, %s118
      %p124 = scmp.eq.s32.totalorder %s14, 0
      %p125 = por %p123, %p124
      %p126 = scmp.ne.s32.totalorder %s115, %s118
      %p127 = scmp.eq.s32.totalorder %s19, 1
      %p128 = por %p126, %p127
      %p129 = scmp.ne.s32.totalorder %s118, %s119
      %p130 = scmp.eq.s32.totalorder %s19, 0
      %p131 = por %p129, %p130
      %p132 = scmp.ne.s32.totalorder %s118, %s119
      %p133 = scmp.eq.s32.totalorder %s20, 1
      %p134 = por %p132, %p133
      %p136 = scmp.ne.s32.totalorder %s119, %s135
      %p137 = scmp.eq.s32.totalorder %s20, 0
      %p138 = por %p136, %p137
      %s139 = ssub.s32 %s21, %s33
      %p140 = scmp.eq.s32.totalorder %s139, 0
      %s142 = sadd.s32 %s141, 1
      %s143 = scalar_select %p140, %s141, %s142
      %p146 = pneg %p140
      %p147 = scmp.eq.s32.totalorder %s14, 1
      %p148 = por %p146, %p147
      %p149 = scmp.ne.s32.totalorder %s141, %s144
      %p150 = scmp.eq.s32.totalorder %s14, 0
      %p151 = por %p149, %p150
      %p152 = scmp.ne.s32.totalorder %s141, %s144
      %p153 = scmp.eq.s32.totalorder %s19, 1
      %p154 = por %p152, %p153
      %p155 = scmp.ne.s32.totalorder %s144, %s145
      %p156 = scmp.eq.s32.totalorder %s19, 0
      %p157 = por %p155, %p156
      %p158 = scmp.ne.s32.totalorder %s144, %s145
      %p159 = scmp.eq.s32.totalorder %s20, 1
      %p160 = por %p158, %p159
      %p162 = scmp.ne.s32.totalorder %s145, %s161
      %p163 = scmp.eq.s32.totalorder %s20, 0
      %p164 = por %p162, %p163
      %p165 = scmp.le.s32.totalorder 1, %s14
      %p166 = scmp.lt.s32.totalorder %s14, 3
      %p167 = pnand %p165, %p166
      %p168 = pneg %p167
      // Predicated region
      $region9: #{per_group_lane_counts.1} parent=5 // pred_check
        _
      $region10: #{per_group_lane_counts.1} parent=5 // pred_check_branch
        %170 = sbr.rel (%p167) target = $region12
      $region11: #{per_group_lane_counts.1} parent=5 // pred_region
        %s171 = ssub.s32 %s14, 1
        // Predicated region
        $region13: #{per_group_lane_counts.1} parent=11 // pred_check
          %p172 = pneg %p47
        $region14: #{per_group_lane_counts.1} parent=11 // pred_check_branch
          %174 = sbr.rel (%p172) target = $region16
        $region15: #{per_group_lane_counts.1} parent=11 // pred_region
          _
        $region16: #{per_group_lane_counts.1} parent=11 // pred_fallthru
          _
      $region12: #{per_group_lane_counts.1} parent=5 // pred_fallthru
        _
      %p175 = scmp.lt.s32.totalorder %s14, 2
      // Predicated region
      $region17: #{per_group_lane_counts.1} parent=5 // pred_check
        %p176 = pneg %p175
      $region18: #{per_group_lane_counts.1} parent=5 // pred_check_branch
        %178 = sbr.rel (%p176) target = $region20
      $region19: #{per_group_lane_counts.1} parent=5 // pred_region
        // Predicated region
        $region21: #{per_group_lane_counts.1} parent=19 // pred_check
          %p179 = pneg %p69
        $region22: #{per_group_lane_counts.1} parent=19 // pred_check_branch
          %181 = sbr.rel (%p179) target = $region24
        $region23: #{per_group_lane_counts.1} parent=19 // pred_region
          %s182 = sadd.s32 %s21, %s22
          %s183 = smul.u32 4, %s182
          %p184 = scmp.lt.s32.totalorder %s183, 7
          %s185 = scalar_select %p184, %s183, 7
          %s186 = smul.addr %s185, 8
          %s187 = scalar_lea.vmem %s1, %s186
          %s188 = sadd.s32 %s21, %s22
          %s189 = smul.u32 4, %s188
        $region24: #{per_group_lane_counts.1} parent=19 // pred_fallthru
          _
        // Predicated region
        $region25: #{per_group_lane_counts.1} parent=19 // pred_check
          %p190 = pneg %p97
        $region26: #{per_group_lane_counts.1} parent=19 // pred_check_branch
          %192 = sbr.rel (%p190) target = $region28
        $region27: #{per_group_lane_counts.1} parent=19 // pred_region
          %s193 = sadd.s32 %s21, %s22
          %p194 = scmp.lt.s32.totalorder %s193, 1
          %s195 = scalar_select %p194, %s193, 1
          %s196 = smul.addr %s195, 8
          %s197 = scalar_lea.vmem %s2, %s196
          %s198 = sadd.s32 %s21, %s22
        $region28: #{per_group_lane_counts.1} parent=19 // pred_fallthru
          _
        // Predicated region
        $region29: #{per_group_lane_counts.1} parent=19 // pred_check
          %p199 = pneg %p125
        $region30: #{per_group_lane_counts.1} parent=19 // pred_check_branch
          %201 = sbr.rel (%p199) target = $region32
        $region31: #{per_group_lane_counts.1} parent=19 // pred_region
          %s202 = sand.u32 %s115, 1
          %s203 = sand.u32 %s115, 1
          %s204 = smul.addr %s203, 16
          %s205 = scalar_lea.vmem [#allocation3], %s204
          %s206 = sadd.s32 %s21, %s22
          %s207 = smul.addr %s206, 8
          %s208 = scalar_lea.vmem %s3, %s207
          // Predicated region
          $region33: #{per_group_lane_counts.1} parent=31 // pred_check
            _
          $region34: #{per_group_lane_counts.1} parent=31 // pred_check_branch
            %210 = sbr.rel (0) target = $region36
          $region35: #{per_group_lane_counts.1} parent=31 // pred_region
            // Predicated region
            $region37: #{per_group_lane_counts.1} parent=35 // pred_check
              _
            $region38: #{per_group_lane_counts.1} parent=35 // pred_check_branch
              %212 = sbr.rel (0) target = $region40
            $region39: #{per_group_lane_counts.1} parent=35 // pred_region
              // Predicated region
              $region52: #{per_group_lane_counts.1} parent=39 // pred_check
                _
              $region53: #{per_group_lane_counts.1} parent=39 // pred_check_branch
                %230 = sbr.rel (0) target = $region55
              $region54: #{per_group_lane_counts.1} parent=39 // pred_region
                loop: start=0, step=1, limit=1
                $region56: #{per_group_lane_counts.1} parent=54 // loop_pre_header
                  _
                $region57: #{per_group_lane_counts.1} parent=54 // loop_header
                  %s232 = sphi 0, %s236
                  %p233 = scmp.ge.s32.totalorder %s232, 1
                  %s237 = sphi %s208, %s208
                  %s238 = sphi %s205, %s205
                $region58: #{per_group_lane_counts.1} parent=54 // loop_header_branch
                  %235 = sbr.rel (%p233) target = $region62
                $region59: #{per_group_lane_counts.1} parent=54 // loop_body
                  %v239 = vld [vmem:[%s237] sm:$0xff]
                  %240 = vst [vmem:[%s238] sm:$0xff] %v239
                  %v241 = vld [vmem:[%s237 + $0x10] sm:$0xff]
                  %242 = vst [vmem:[%s238 + $0x8] sm:$0xff] %v241
                $region60: #{per_group_lane_counts.1} parent=54 // loop_footer
                  %s236 = sadd.s32 1, %s232
                $region61: #{per_group_lane_counts.1} parent=54 // loop_footer_branch
                  %231 = sbr.rel target = $region57
                $region62: #{per_group_lane_counts.1} parent=54 // loop_exit
                  _
              $region55: #{per_group_lane_counts.1} parent=39 // pred_fallthru
                _
              // Predicated region
              $region63: #{per_group_lane_counts.1} parent=39 // pred_check
                _
              $region64: #{per_group_lane_counts.1} parent=39 // pred_check_branch
                %244 = sbr.rel target = $region66
              $region65: #{per_group_lane_counts.1} parent=39 // pred_region
                _
              $region66: #{per_group_lane_counts.1} parent=39 // pred_fallthru
                _
            $region40: #{per_group_lane_counts.1} parent=35 // pred_fallthru
              _
            // Predicated region
            $region41: #{per_group_lane_counts.1} parent=35 // pred_check
              _
            $region42: #{per_group_lane_counts.1} parent=35 // pred_check_branch
              %214 = sbr.rel target = $region44
            $region43: #{per_group_lane_counts.1} parent=35 // pred_region
              %s216 = ssub.s32 256, 1
              loop: start=0, step=1, limit=1
              $region45: #{per_group_lane_counts.1} parent=43 // loop_pre_header
                _
              $region46: #{per_group_lane_counts.1} parent=43 // loop_header
                %s218 = sphi 0, %s222
                %p219 = scmp.ge.s32.totalorder %s218, 1
                %s223 = sphi %s208, %s208
                %s224 = sphi %s205, %s205
              $region47: #{per_group_lane_counts.1} parent=43 // loop_header_branch
                %221 = sbr.rel (%p219) target = $region51
              $region48: #{per_group_lane_counts.1} parent=43 // loop_body
                %v225 = vld [vmem:[%s223] sm:%s216]
                %226 = vst [vmem:[%s224] sm:%s216] %v225
                %v227 = vld [vmem:[%s223 + $0x10] sm:%s216]
                %228 = vst [vmem:[%s224 + $0x8] sm:%s216] %v227
              $region49: #{per_group_lane_counts.1} parent=43 // loop_footer
                %s222 = sadd.s32 1, %s218
              $region50: #{per_group_lane_counts.1} parent=43 // loop_footer_branch
                %217 = sbr.rel target = $region46
              $region51: #{per_group_lane_counts.1} parent=43 // loop_exit
                _
            $region44: #{per_group_lane_counts.1} parent=35 // pred_fallthru
              _
          $region36: #{per_group_lane_counts.1} parent=31 // pred_fallthru
            _
          %245 = vnop
        $region32: #{per_group_lane_counts.1} parent=19 // pred_fallthru
          _
      $region20: #{per_group_lane_counts.1} parent=5 // pred_fallthru
        _
      %p246 = scmp.le.s32.totalorder 1, %s14
      %p247 = scmp.lt.s32.totalorder %s14, 3
      %p248 = pnand %p246, %p247
      %p249 = pneg %p248
      // Predicated region
      $region67: #{per_group_lane_counts.1} parent=5 // pred_check
        _
      $region68: #{per_group_lane_counts.1} parent=5 // pred_check_branch
        %251 = sbr.rel (%p248) target = $region70
      $region69: #{per_group_lane_counts.1} parent=5 // pred_region
        %s252 = ssub.s32 %s14, 1
        %s253 = sand.u32 %s118, 1
        %s254 = sand.u32 %s118, 1
        %s255 = smul.addr %s254, 16
        %s256 = scalar_lea.vmem [#allocation3], %s255
        // Predicated region
        $region71: #{per_group_lane_counts.1} parent=69 // pred_check
          %p257 = pneg %p131
        $region72: #{per_group_lane_counts.1} parent=69 // pred_check_branch
          %259 = sbr.rel (%p257) target = $region74
        $region73: #{per_group_lane_counts.1} parent=69 // pred_region
          _
        $region74: #{per_group_lane_counts.1} parent=69 // pred_fallthru
          _
        %p260 = pneg %p47
        %p261 = pneg %p44
        %s262 = sadd.s32 %s23, %s24
        %s263 = smul.u32 4, %s262
        %p264 = scmp.lt.s32.totalorder %s263, 7
        %s265 = scalar_select %p264, %s263, 7
        %s266 = smul.addr %s265, 8
        %s267 = scalar_lea.vmem %s1, %s266
        %p268 = pneg %p75
        %p269 = pneg %p72
        %s270 = sadd.s32 %s23, %s24
        %p271 = scmp.lt.s32.totalorder %s270, 1
        %s272 = scalar_select %p271, %s270, 1
        %s273 = smul.addr %s272, 8
        %s274 = scalar_lea.vmem %s2, %s273
        %p275 = pneg %p103
        %p276 = pneg %p100
        %s277 = sand.u32 %s118, 1
        %s278 = sand.u32 %s118, 1
        %s279 = smul.addr %s278, 16
        %s280 = scalar_lea.vmem [#allocation3], %s279
        %p281 = pneg %p131
        %p282 = pneg %p128
        %p283 = pneg %p157
        %p284 = pneg %p154
        %s285 = sand.u32 %s144, 1
        %s286 = scalar_lea.sflag [#allocation5], %s285
        %s287 = sand.u32 %s144, 1
        %s288 = smul.addr %s287, 192
        %s289 = scalar_lea.vmem [#allocation4], %s288
        %s290 = sadd.s32 %s23, %s24
        %s291 = smul.u32 4, %s290
        %p292 = scmp.lt.s32.totalorder %s291, 7
        %s293 = scalar_select %p292, %s291, 7
        %s294 = smul.addr %s293, 8
        %s295 = scalar_lea.vmem %s1, %s294
        %s296 = sadd.s32 %s23, %s24
        %s297 = smul.u32 4, %s296
        %s298 = sadd.s32 %s23, %s24
        %p299 = scmp.lt.s32.totalorder %s298, 1
        %s300 = scalar_select %p299, %s298, 1
        %s301 = smul.addr %s300, 8
        %s302 = scalar_lea.vmem %s2, %s301
        %s303 = sadd.s32 %s23, %s24
        %s304 = sadd.s32 %s23, %s24
        %s305 = sld [smem:[#allocation2]]
        %v306 = vld [vmem:[%s295] sm:$0xff]
        %v307 = vld [vmem:[%s295 + $0x8] sm:$0xff]
        %v308 = vld [vmem:[%s295 + $0x10] sm:$0xff]
        %v309 = vld [vmem:[%s295 + $0x18] sm:$0xff]
        %v310 = vld [vmem:[%s302] sm:$0xff]
        %v311 = vunpack.c.0.s8 %v310
        %v312 = vunpack.c.1.s8 %v310
        %v313 = vunpack.c.2.s8 %v310
        %v314 = vunpack.c.3.s8 %v310
        %v315 = vcvt.s32.f32 %v311
        %v316 = vcvt.s32.f32 %v312
        %v317 = vcvt.s32.f32 %v313
        %v318 = vcvt.s32.f32 %v314
        %v319 = vstv %s305
        %vm320 = vcmp.gt.f32.partialorder %v306, %v319
        %vm321 = vcmp.gt.f32.partialorder %v307, %v319
        %vm322 = vcmp.gt.f32.partialorder %v308, %v319
        %vm323 = vcmp.gt.f32.partialorder %v309, %v319
        %v324 = vsel %vm320, 1, 0
        %v325 = vsel %vm321, 1, 0
        %v326 = vsel %vm322, 1, 0
        %v327 = vsel %vm323, 1, 0
        %v328 = vcvt.s32.f32 %v324
        %v329 = vcvt.s32.f32 %v325
        %v330 = vcvt.s32.f32 %v326
        %v331 = vcvt.s32.f32 %v327
        %v332 = vmul.f32 %v328, %v315
        %v333 = vmul.f32 %v329, %v316
        %v334 = vmul.f32 %v330, %v317
        %v335 = vmul.f32 %v331, %v318
        %v336 = vld [vmem:[%s256] sm:$0xff]
        %v337 = vunpack.c.0.s8 %v336
        %v338 = vunpack.c.1.s8 %v336
        %v339 = vunpack.c.2.s8 %v336
        %v340 = vunpack.c.3.s8 %v336
        %vm341 = vcmp.eq.s32.totalorder %v337, 0
        %vm342 = vcmp.eq.s32.totalorder %v338, 0
        %vm343 = vcmp.eq.s32.totalorder %v339, 0
        %vm344 = vcmp.eq.s32.totalorder %v340, 0
        %v345 = vsel %vm341, 1, 0
        %v346 = vsel %vm342, 1, 0
        %v347 = vsel %vm343, 1, 0
        %v348 = vsel %vm344, 1, 0
        %v349 = vcvt.s32.f32 %v345
        %v350 = vcvt.s32.f32 %v346
        %v351 = vcvt.s32.f32 %v347
        %v352 = vcvt.s32.f32 %v348
        %v353 = vadd.f32 %v349, %v350
        %v354 = vadd.f32 %v353, %v351
        %v355 = vadd.f32 %v354, %v352
        %v356 = vadd.f32 %v355, 0.0
        %v357 = vmul.f32 %v349, %v328
        %v358 = vmul.f32 %v350, %v329
        %v359 = vmul.f32 %v351, %v330
        %v360 = vmul.f32 %v352, %v331
        %v361 = vadd.f32 %v357, %v358
        %v362 = vadd.f32 %v361, %v359
        %v363 = vadd.f32 %v362, %v360
        %v364 = vadd.f32 %v363, 0.0
        %v365 = vmul.f32 %v349, %v315
        %v366 = vmul.f32 %v350, %v316
        %v367 = vmul.f32 %v351, %v317
        %v368 = vmul.f32 %v352, %v318
        %v369 = vadd.f32 %v365, %v366
        %v370 = vadd.f32 %v369, %v367
        %v371 = vadd.f32 %v370, %v368
        %v372 = vadd.f32 %v371, 0.0
        %v373 = vmul.f32 %v349, %v332
        %v374 = vmul.f32 %v350, %v333
        %v375 = vmul.f32 %v351, %v334
        %v376 = vmul.f32 %v352, %v335
        %v377 = vadd.f32 %v373, %v374
        %v378 = vadd.f32 %v377, %v375
        %v379 = vadd.f32 %v378, %v376
        %v380 = vadd.f32 %v379, 0.0
        %vm381 = vcmp.eq.s32.totalorder %v337, 1
        %vm382 = vcmp.eq.s32.totalorder %v338, 1
        %vm383 = vcmp.eq.s32.totalorder %v339, 1
        %vm384 = vcmp.eq.s32.totalorder %v340, 1
        %v385 = vsel %vm381, 1, 0
        %v386 = vsel %vm382, 1, 0
        %v387 = vsel %vm383, 1, 0
        %v388 = vsel %vm384, 1, 0
        %v389 = vcvt.s32.f32 %v385
        %v390 = vcvt.s32.f32 %v386
        %v391 = vcvt.s32.f32 %v387
        %v392 = vcvt.s32.f32 %v388
        %v393 = vadd.f32 %v389, %v390
        %v394 = vadd.f32 %v393, %v391
        %v395 = vadd.f32 %v394, %v392
        %v396 = vadd.f32 %v395, 0.0
        %v397 = vmul.f32 %v389, %v328
        %v398 = vmul.f32 %v390, %v329
        %v399 = vmul.f32 %v391, %v330
        %v400 = vmul.f32 %v392, %v331
        %v401 = vadd.f32 %v397, %v398
        %v402 = vadd.f32 %v401, %v399
        %v403 = vadd.f32 %v402, %v400
        %v404 = vadd.f32 %v403, 0.0
        %v405 = vmul.f32 %v389, %v315
        %v406 = vmul.f32 %v390, %v316
        %v407 = vmul.f32 %v391, %v317
        %v408 = vmul.f32 %v392, %v318
        %v409 = vadd.f32 %v405, %v406
        %v410 = vadd.f32 %v409, %v407
        %v411 = vadd.f32 %v410, %v408
        %v412 = vadd.f32 %v411, 0.0
        %v413 = vmul.f32 %v389, %v332
        %v414 = vmul.f32 %v390, %v333
        %v415 = vmul.f32 %v391, %v334
        %v416 = vmul.f32 %v392, %v335
        %v417 = vadd.f32 %v413, %v414
        %v418 = vadd.f32 %v417, %v415
        %v419 = vadd.f32 %v418, %v416
        %v420 = vadd.f32 %v419, 0.0
        %vm421 = vcmp.eq.s32.totalorder %v337, 2
        %vm422 = vcmp.eq.s32.totalorder %v338, 2
        %vm423 = vcmp.eq.s32.totalorder %v339, 2
        %vm424 = vcmp.eq.s32.totalorder %v340, 2
        %v425 = vsel %vm421, 1, 0
        %v426 = vsel %vm422, 1, 0
        %v427 = vsel %vm423, 1, 0
        %v428 = vsel %vm424, 1, 0
        %v429 = vcvt.s32.f32 %v425
        %v430 = vcvt.s32.f32 %v426
        %v431 = vcvt.s32.f32 %v427
        %v432 = vcvt.s32.f32 %v428
        %v433 = vadd.f32 %v429, %v430
        %v434 = vadd.f32 %v433, %v431
        %v435 = vadd.f32 %v434, %v432
        %v436 = vadd.f32 %v435, 0.0
        %v437 = vmul.f32 %v429, %v328
        %v438 = vmul.f32 %v430, %v329
        %v439 = vmul.f32 %v431, %v330
        %v440 = vmul.f32 %v432, %v331
        %v441 = vadd.f32 %v437, %v438
        %v442 = vadd.f32 %v441, %v439
        %v443 = vadd.f32 %v442, %v440
        %v444 = vadd.f32 %v443, 0.0
        %v445 = vmul.f32 %v429, %v315
        %v446 = vmul.f32 %v430, %v316
        %v447 = vmul.f32 %v431, %v317
        %v448 = vmul.f32 %v432, %v318
        %v449 = vadd.f32 %v445, %v446
        %v450 = vadd.f32 %v449, %v447
        %v451 = vadd.f32 %v450, %v448
        %v452 = vadd.f32 %v451, 0.0
        %v453 = vmul.f32 %v429, %v332
        %v454 = vmul.f32 %v430, %v333
        %v455 = vmul.f32 %v431, %v334
        %v456 = vmul.f32 %v432, %v335
        %v457 = vadd.f32 %v453, %v454
        %v458 = vadd.f32 %v457, %v455
        %v459 = vadd.f32 %v458, %v456
        %v460 = vadd.f32 %v459, 0.0
        %s461 = sadd.s32 0, 1
        %s462 = smul.addr %s461, 8
        %s463 = scalar_lea.vmem %s256, %s462 [#allocation3]
        %v464 = vld [vmem:[%s463] sm:$0xff]
        %v465 = vunpack.c.0.s8 %v464
        %v466 = vunpack.c.1.s8 %v464
        %v467 = vunpack.c.2.s8 %v464
        %v468 = vunpack.c.3.s8 %v464
        %vm469 = vcmp.eq.s32.totalorder %v465, 0
        %vm470 = vcmp.eq.s32.totalorder %v466, 0
        %vm471 = vcmp.eq.s32.totalorder %v467, 0
        %vm472 = vcmp.eq.s32.totalorder %v468, 0
        %v473 = vsel %vm469, 1, 0
        %v474 = vsel %vm470, 1, 0
        %v475 = vsel %vm471, 1, 0
        %v476 = vsel %vm472, 1, 0
        %v477 = vcvt.s32.f32 %v473
        %v478 = vcvt.s32.f32 %v474
        %v479 = vcvt.s32.f32 %v475
        %v480 = vcvt.s32.f32 %v476
        %v481 = vadd.f32 %v477, %v478
        %v482 = vadd.f32 %v481, %v479
        %v483 = vadd.f32 %v482, %v480
        %v484 = vadd.f32 %v483, 0.0
        %v485 = vmul.f32 %v477, %v328
        %v486 = vmul.f32 %v478, %v329
        %v487 = vmul.f32 %v479, %v330
        %v488 = vmul.f32 %v480, %v331
        %v489 = vadd.f32 %v485, %v486
        %v490 = vadd.f32 %v489, %v487
        %v491 = vadd.f32 %v490, %v488
        %v492 = vadd.f32 %v491, 0.0
        %v493 = vmul.f32 %v477, %v315
        %v494 = vmul.f32 %v478, %v316
        %v495 = vmul.f32 %v479, %v317
        %v496 = vmul.f32 %v480, %v318
        %v497 = vadd.f32 %v493, %v494
        %v498 = vadd.f32 %v497, %v495
        %v499 = vadd.f32 %v498, %v496
        %v500 = vadd.f32 %v499, 0.0
        %v501 = vmul.f32 %v477, %v332
        %v502 = vmul.f32 %v478, %v333
        %v503 = vmul.f32 %v479, %v334
        %v504 = vmul.f32 %v480, %v335
        %v505 = vadd.f32 %v501, %v502
        %v506 = vadd.f32 %v505, %v503
        %v507 = vadd.f32 %v506, %v504
        %v508 = vadd.f32 %v507, 0.0
        %vm509 = vcmp.eq.s32.totalorder %v465, 1
        %vm510 = vcmp.eq.s32.totalorder %v466, 1
        %vm511 = vcmp.eq.s32.totalorder %v467, 1
        %vm512 = vcmp.eq.s32.totalorder %v468, 1
        %v513 = vsel %vm509, 1, 0
        %v514 = vsel %vm510, 1, 0
        %v515 = vsel %vm511, 1, 0
        %v516 = vsel %vm512, 1, 0
        %v517 = vcvt.s32.f32 %v513
        %v518 = vcvt.s32.f32 %v514
        %v519 = vcvt.s32.f32 %v515
        %v520 = vcvt.s32.f32 %v516
        %v521 = vadd.f32 %v517, %v518
        %v522 = vadd.f32 %v521, %v519
        %v523 = vadd.f32 %v522, %v520
        %v524 = vadd.f32 %v523, 0.0
        %v525 = vmul.f32 %v517, %v328
        %v526 = vmul.f32 %v518, %v329
        %v527 = vmul.f32 %v519, %v330
        %v528 = vmul.f32 %v520, %v331
        %v529 = vadd.f32 %v525, %v526
        %v530 = vadd.f32 %v529, %v527
        %v531 = vadd.f32 %v530, %v528
        %v532 = vadd.f32 %v531, 0.0
        %v533 = vmul.f32 %v517, %v315
        %v534 = vmul.f32 %v518, %v316
        %v535 = vmul.f32 %v519, %v317
        %v536 = vmul.f32 %v520, %v318
        %v537 = vadd.f32 %v533, %v534
        %v538 = vadd.f32 %v537, %v535
        %v539 = vadd.f32 %v538, %v536
        %v540 = vadd.f32 %v539, 0.0
        %v541 = vmul.f32 %v517, %v332
        %v542 = vmul.f32 %v518, %v333
        %v543 = vmul.f32 %v519, %v334
        %v544 = vmul.f32 %v520, %v335
        %v545 = vadd.f32 %v541, %v542
        %v546 = vadd.f32 %v545, %v543
        %v547 = vadd.f32 %v546, %v544
        %v548 = vadd.f32 %v547, 0.0
        %vm549 = vcmp.eq.s32.totalorder %v465, 2
        %vm550 = vcmp.eq.s32.totalorder %v466, 2
        %vm551 = vcmp.eq.s32.totalorder %v467, 2
        %vm552 = vcmp.eq.s32.totalorder %v468, 2
        %v553 = vsel %vm549, 1, 0
        %v554 = vsel %vm550, 1, 0
        %v555 = vsel %vm551, 1, 0
        %v556 = vsel %vm552, 1, 0
        %v557 = vcvt.s32.f32 %v553
        %v558 = vcvt.s32.f32 %v554
        %v559 = vcvt.s32.f32 %v555
        %v560 = vcvt.s32.f32 %v556
        %v561 = vadd.f32 %v557, %v558
        %v562 = vadd.f32 %v561, %v559
        %v563 = vadd.f32 %v562, %v560
        %v564 = vadd.f32 %v563, 0.0
        %v565 = vmul.f32 %v557, %v328
        %v566 = vmul.f32 %v558, %v329
        %v567 = vmul.f32 %v559, %v330
        %v568 = vmul.f32 %v560, %v331
        %v569 = vadd.f32 %v565, %v566
        %v570 = vadd.f32 %v569, %v567
        %v571 = vadd.f32 %v570, %v568
        %v572 = vadd.f32 %v571, 0.0
        %v573 = vmul.f32 %v557, %v315
        %v574 = vmul.f32 %v558, %v316
        %v575 = vmul.f32 %v559, %v317
        %v576 = vmul.f32 %v560, %v318
        %v577 = vadd.f32 %v573, %v574
        %v578 = vadd.f32 %v577, %v575
        %v579 = vadd.f32 %v578, %v576
        %v580 = vadd.f32 %v579, 0.0
        %v581 = vmul.f32 %v557, %v332
        %v582 = vmul.f32 %v558, %v333
        %v583 = vmul.f32 %v559, %v334
        %v584 = vmul.f32 %v560, %v335
        %v585 = vadd.f32 %v581, %v582
        %v586 = vadd.f32 %v585, %v583
        %v587 = vadd.f32 %v586, %v584
        %v588 = vadd.f32 %v587, 0.0
        %p589 = scmp.eq.s32.totalorder %s24, 0
        // Predicated region
        $region75: #{per_group_lane_counts.1} parent=69 // pred_check
          %p590 = pneg %p589
        $region76: #{per_group_lane_counts.1} parent=69 // pred_check_branch
          %592 = sbr.rel (%p590) target = $region78
        $region77: #{per_group_lane_counts.1} parent=69 // pred_region
          %593 = vst [vmem:[%s289] sm:$0xff] %v356
          %594 = vst [vmem:[%s289 + $0x8] sm:$0xff] %v364
          %595 = vst [vmem:[%s289 + $0x10] sm:$0xff] %v372
          %596 = vst [vmem:[%s289 + $0x18] sm:$0xff] %v380
          %597 = vst [vmem:[%s289 + $0x20] sm:$0xff] %v396
          %598 = vst [vmem:[%s289 + $0x28] sm:$0xff] %v404
          %599 = vst [vmem:[%s289 + $0x30] sm:$0xff] %v412
          %600 = vst [vmem:[%s289 + $0x38] sm:$0xff] %v420
          %601 = vst [vmem:[%s289 + $0x40] sm:$0xff] %v436
          %602 = vst [vmem:[%s289 + $0x48] sm:$0xff] %v444
          %603 = vst [vmem:[%s289 + $0x50] sm:$0xff] %v452
          %604 = vst [vmem:[%s289 + $0x58] sm:$0xff] %v460
          %605 = vst [vmem:[%s289 + $0x60] sm:$0xff] %v484
          %606 = vst [vmem:[%s289 + $0x68] sm:$0xff] %v492
          %607 = vst [vmem:[%s289 + $0x70] sm:$0xff] %v500
          %608 = vst [vmem:[%s289 + $0x78] sm:$0xff] %v508
          %609 = vst [vmem:[%s289 + $0x80] sm:$0xff] %v524
          %610 = vst [vmem:[%s289 + $0x88] sm:$0xff] %v532
          %611 = vst [vmem:[%s289 + $0x90] sm:$0xff] %v540
          %612 = vst [vmem:[%s289 + $0x98] sm:$0xff] %v548
          %613 = vst [vmem:[%s289 + $0xa0] sm:$0xff] %v564
          %614 = vst [vmem:[%s289 + $0xa8] sm:$0xff] %v572
          %615 = vst [vmem:[%s289 + $0xb0] sm:$0xff] %v580
          %616 = vst [vmem:[%s289 + $0xb8] sm:$0xff] %v588
        $region78: #{per_group_lane_counts.1} parent=69 // pred_fallthru
          _
        %p617 = scmp.ne.s32.totalorder %s24, 0
        // Predicated region
        $region79: #{per_group_lane_counts.1} parent=69 // pred_check
          %p618 = pneg %p617
        $region80: #{per_group_lane_counts.1} parent=69 // pred_check_branch
          %620 = sbr.rel (%p618) target = $region82
        $region81: #{per_group_lane_counts.1} parent=69 // pred_region
          %v621 = vld [vmem:[%s289] sm:$0xff]
          %v622 = vld [vmem:[%s289 + $0x8] sm:$0xff]
          %v623 = vld [vmem:[%s289 + $0x10] sm:$0xff]
          %v624 = vld [vmem:[%s289 + $0x18] sm:$0xff]
          %v625 = vld [vmem:[%s289 + $0x20] sm:$0xff]
          %v626 = vld [vmem:[%s289 + $0x28] sm:$0xff]
          %v627 = vld [vmem:[%s289 + $0x30] sm:$0xff]
          %v628 = vld [vmem:[%s289 + $0x38] sm:$0xff]
          %v629 = vld [vmem:[%s289 + $0x40] sm:$0xff]
          %v630 = vld [vmem:[%s289 + $0x48] sm:$0xff]
          %v631 = vld [vmem:[%s289 + $0x50] sm:$0xff]
          %v632 = vld [vmem:[%s289 + $0x58] sm:$0xff]
          %v633 = vld [vmem:[%s289 + $0x60] sm:$0xff]
          %v634 = vld [vmem:[%s289 + $0x68] sm:$0xff]
          %v635 = vld [vmem:[%s289 + $0x70] sm:$0xff]
          %v636 = vld [vmem:[%s289 + $0x78] sm:$0xff]
          %v637 = vld [vmem:[%s289 + $0x80] sm:$0xff]
          %v638 = vld [vmem:[%s289 + $0x88] sm:$0xff]
          %v639 = vld [vmem:[%s289 + $0x90] sm:$0xff]
          %v640 = vld [vmem:[%s289 + $0x98] sm:$0xff]
          %v641 = vld [vmem:[%s289 + $0xa0] sm:$0xff]
          %v642 = vld [vmem:[%s289 + $0xa8] sm:$0xff]
          %v643 = vld [vmem:[%s289 + $0xb0] sm:$0xff]
          %v644 = vld [vmem:[%s289 + $0xb8] sm:$0xff]
          %v645 = vadd.f32 %v621, %v356
          %v646 = vadd.f32 %v622, %v364
          %v647 = vadd.f32 %v623, %v372
          %v648 = vadd.f32 %v624, %v380
          %v649 = vadd.f32 %v625, %v396
          %v650 = vadd.f32 %v626, %v404
          %v651 = vadd.f32 %v627, %v412
          %v652 = vadd.f32 %v628, %v420
          %v653 = vadd.f32 %v629, %v436
          %v654 = vadd.f32 %v630, %v444
          %v655 = vadd.f32 %v631, %v452
          %v656 = vadd.f32 %v632, %v460
          %v657 = vadd.f32 %v633, %v484
          %v658 = vadd.f32 %v634, %v492
          %v659 = vadd.f32 %v635, %v500
          %v660 = vadd.f32 %v636, %v508
          %v661 = vadd.f32 %v637, %v524
          %v662 = vadd.f32 %v638, %v532
          %v663 = vadd.f32 %v639, %v540
          %v664 = vadd.f32 %v640, %v548
          %v665 = vadd.f32 %v641, %v564
          %v666 = vadd.f32 %v642, %v572
          %v667 = vadd.f32 %v643, %v580
          %v668 = vadd.f32 %v644, %v588
          %669 = vst [vmem:[%s289] sm:$0xff] %v645
          %670 = vst [vmem:[%s289 + $0x8] sm:$0xff] %v646
          %671 = vst [vmem:[%s289 + $0x10] sm:$0xff] %v647
          %672 = vst [vmem:[%s289 + $0x18] sm:$0xff] %v648
          %673 = vst [vmem:[%s289 + $0x20] sm:$0xff] %v649
          %674 = vst [vmem:[%s289 + $0x28] sm:$0xff] %v650
          %675 = vst [vmem:[%s289 + $0x30] sm:$0xff] %v651
          %676 = vst [vmem:[%s289 + $0x38] sm:$0xff] %v652
          %677 = vst [vmem:[%s289 + $0x40] sm:$0xff] %v653
          %678 = vst [vmem:[%s289 + $0x48] sm:$0xff] %v654
          %679 = vst [vmem:[%s289 + $0x50] sm:$0xff] %v655
          %680 = vst [vmem:[%s289 + $0x58] sm:$0xff] %v656
          %681 = vst [vmem:[%s289 + $0x60] sm:$0xff] %v657
          %682 = vst [vmem:[%s289 + $0x68] sm:$0xff] %v658
          %683 = vst [vmem:[%s289 + $0x70] sm:$0xff] %v659
          %684 = vst [vmem:[%s289 + $0x78] sm:$0xff] %v660
          %685 = vst [vmem:[%s289 + $0x80] sm:$0xff] %v661
          %686 = vst [vmem:[%s289 + $0x88] sm:$0xff] %v662
          %687 = vst [vmem:[%s289 + $0x90] sm:$0xff] %v663
          %688 = vst [vmem:[%s289 + $0x98] sm:$0xff] %v664
          %689 = vst [vmem:[%s289 + $0xa0] sm:$0xff] %v665
          %690 = vst [vmem:[%s289 + $0xa8] sm:$0xff] %v666
          %691 = vst [vmem:[%s289 + $0xb0] sm:$0xff] %v667
          %692 = vst [vmem:[%s289 + $0xb8] sm:$0xff] %v668
        $region82: #{per_group_lane_counts.1} parent=69 // pred_fallthru
          _
        %s693 = sand.u32 %s144, 1
        %s694 = scalar_lea.sflag [#allocation5], %s693
        %s695 = sand.u32 %s144, 1
        %s696 = smul.addr %s695, 192
        %s697 = scalar_lea.vmem [#allocation4], %s696
        // Predicated region
        $region83: #{per_group_lane_counts.1} parent=69 // pred_check
          %p698 = pneg %p154
        $region84: #{per_group_lane_counts.1} parent=69 // pred_check_branch
          %700 = sbr.rel (%p698) target = $region86
        $region85: #{per_group_lane_counts.1} parent=69 // pred_region
          %702 = vsyncadd %s694, 0
          %s703 = smul.addr %s23, 24
          %s704 = smul.addr %s703, 8
          %s705 = scalar_lea.hbm %s4, %s704
          %s706 = sshll.u32 %s697, 4
          %s707 = int_to_ptr.vmem [resolvable:$true] %s706
          %s708 = sshll.u32 %s705, 4
          %s709 = int_to_ptr.hbm [resolvable:$true] %s708
          %714 = dma.vmem_to_hbm [thread:$0]  %s707, 3072, %s709, %s694, 128, 128, 8
        $region86: #{per_group_lane_counts.1} parent=69 // pred_fallthru
          _
      $region70: #{per_group_lane_counts.1} parent=5 // pred_fallthru
        _
      %p715 = scmp.le.s32.totalorder 2, %s14
      // Predicated region
      $region87: #{per_group_lane_counts.1} parent=5 // pred_check
        %p716 = pneg %p715
      $region88: #{per_group_lane_counts.1} parent=5 // pred_check_branch
        %718 = sbr.rel (%p716) target = $region90
      $region89: #{per_group_lane_counts.1} parent=5 // pred_region
        %s719 = ssub.s32 %s14, 2
        // Predicated region
        $region91: #{per_group_lane_counts.1} parent=89 // pred_check
          %p720 = pneg %p160
        $region92: #{per_group_lane_counts.1} parent=89 // pred_check_branch
          %722 = sbr.rel (%p720) target = $region94
        $region93: #{per_group_lane_counts.1} parent=89 // pred_region
          %s723 = sand.u32 %s145, 1
          %s724 = scalar_lea.sflag [#allocation5], %s723
          %s725 = sand.u32 %s145, 1
          %s726 = smul.addr %s725, 192
          %s727 = scalar_lea.vmem [#allocation4], %s726
          %729 = dma.done %s724, 3072
        $region94: #{per_group_lane_counts.1} parent=89 // pred_fallthru
          _
      $region90: #{per_group_lane_counts.1} parent=5 // pred_fallthru
        _
    $region6: #{per_group_lane_counts.1} parent=1 // loop_footer
      %s18 = sadd.s32 1, %s14
    $region7: #{per_group_lane_counts.1} parent=1 // loop_footer_branch
      %13 = sbr.rel target = $region3
    $region8: #{per_group_lane_counts.1} parent=1 // loop_exit
      _
    %730 = vsyncpa [#allocation5], 1
    %s731 = scalar_lea.sflag [#allocation5], 1
    %732 = vsyncpa %s731, 1

</llo_original>
